<compile_context>
chip_gen: v5e
topology: v5e:2x2
jax: 0.10.0
libtpu: 0.0.40
codegen_flags: <defaults>
</compile_context>

<pallas_src>
import functools

import jax
import jax.numpy as jnp
from jax.experimental import pallas as pl
from jax.experimental.pallas import tpu as pltpu

_LANES = 512                # slab lane width: multiple of 128 and of 4
_MAX_ROW_TILE = 512         # ~1 MiB f32 block at 512 lanes
_FAST_PATH_ELEMS = 32 * 1024


def _round_up(x: int, m: int) -> int:
    return ((x + m - 1) // m) * m


def _clip_boxes_kernel(boxes_ref, out_ref, *, width, height):
    x = boxes_ref[...].astype(jnp.float32)
    # Lane position mod 4 selects which bound applies:
    #   0, 1 -> x1, y1 (clamp min 0); 2 -> x2 (clamp max width);
    #   3 -> y2 (clamp max height).
    lane = jax.lax.broadcasted_iota(jnp.int32, x.shape, dimension=1) % 4
    lo = jnp.where(lane < 2, jnp.float32(0.0), jnp.float32(-jnp.inf))
    hi = jnp.where(
        lane == 2,
        jnp.float32(width),
        jnp.where(lane == 3, jnp.float32(height), jnp.float32(jnp.inf)),
    )
    out_ref[...] = jnp.minimum(jnp.maximum(x, lo), hi).astype(out_ref.dtype)


def _clip_boxes_jax(boxes, width, height):
    """Fused pure-JAX clamp — small-size fast path."""
    lo = jnp.array([0.0, 0.0, -jnp.inf, -jnp.inf], dtype=jnp.float32)
    hi = jnp.array([jnp.inf, jnp.inf, float(width), float(height)], dtype=jnp.float32)
    x = boxes.astype(jnp.float32)
    return jnp.minimum(jnp.maximum(x, lo), hi).astype(boxes.dtype)


def clip_boxes(boxes, img):
    """Pallas equivalent of ClipBoxes.forward(boxes, img) (out-of-place)."""
    b_img, _c, height, width = img.shape
    batch, num_boxes, four = boxes.shape
    assert four == 4
    assert batch == b_img, "boxes/img batch mismatch"
    assert jnp.issubdtype(boxes.dtype, jnp.floating), "boxes must be floating point"

    total = batch * num_boxes * 4

    # Fast path: launch overhead would dwarf the work; XLA fuses two clamps.
    if total < _FAST_PATH_ELEMS:
        return _clip_boxes_jax(boxes, width, height)

    C = _LANES
    rows_needed = -(-total // C)                      # ceil(total / C), >= 64 here

    # Pick a row tile that (a) is a multiple of 16 sublanes (works for f32 and
    # packed bf16), (b) caps the block at ~1 MiB, and (c) yields >= 2 grid
    # steps so v7x megacore can split the parallel axis.  Padding waste is at
    # most row_tile - 1 rows (~1 MiB worst case), negligible for these sizes.
    n_target = max(2, -(-rows_needed // _MAX_ROW_TILE))
    row_tile = min(_MAX_ROW_TILE, _round_up(-(-rows_needed // n_target), 16))
    rows = _round_up(rows_needed, row_tile)
    n_tiles = rows // row_tile
    assert n_tiles >= 2

    # Byte-accurate VMEM budget: (in + out) x double buffering of full blocks.
    itemsize = jnp.dtype(boxes.dtype).itemsize
    block_bytes = row_tile * C * itemsize
    assert 2 * 2 * block_bytes <= 12 * 1024 * 1024, "blocks exceed v5e scoped VMEM budget"

    flat = boxes.reshape(-1)                          # contiguous reshape: free
    pad = rows * C - total
    if pad:
        flat = jnp.pad(flat, (0, pad))                # one extra streaming copy, only if misaligned
    slab = flat.reshape(rows, C)

    kernel = functools.partial(_clip_boxes_kernel, width=width, height=height)
    out_slab = pl.pallas_call(
        kernel,
        out_shape=jax.ShapeDtypeStruct((rows, C), boxes.dtype),
        grid=(n_tiles,),
        in_specs=[pl.BlockSpec((row_tile, C), lambda i: (i, 0))],
        out_specs=pl.BlockSpec((row_tile, C), lambda i: (i, 0)),
        compiler_params=pltpu.CompilerParams(dimension_semantics=("parallel",)),
    )(slab)

    out_flat = out_slab.reshape(-1)
    if pad:
        out_flat = out_flat[:total]
    return out_flat.reshape(batch, num_boxes, 4)


def _torch_style_reference(boxes, img):
    """Direct translation of the PyTorch module (out-of-place)."""
    _, _, height, width = img.shape
    ref = boxes
    ref = ref.at[:, :, 0].set(jnp.maximum(ref[:, :, 0], 0.0))
    ref = ref.at[:, :, 1].set(jnp.maximum(ref[:, :, 1], 0.0))
    ref = ref.at[:, :, 2].set(jnp.minimum(ref[:, :, 2], float(width)))
    ref = ref.at[:, :, 3].set(jnp.minimum(ref[:, :, 3], float(height)))
    return ref


if __name__ == "__main__":
    key = jax.random.PRNGKey(0)
    kb, ki, kb2 = jax.random.split(key, 3)

    # Small shapes consistent with the forward pass:
    #   boxes (batch=2, num_boxes=8, 4); img NCHW (2, 4, 16, 16).
    img = jax.random.normal(ki, (2, 4, 16, 16), dtype=jnp.float32)
    boxes = jax.random.normal(kb, (2, 8, 4), dtype=jnp.float32) * 20.0

    out_small = jax.block_until_ready(clip_boxes(boxes, img))   # fast path
    ref_small = _torch_style_reference(boxes, img)
    assert out_small.shape == boxes.shape and out_small.dtype == boxes.dtype
    assert jnp.allclose(out_small, ref_small), "small-shape mismatch vs reference"

    # A moderately larger box set that exercises the Pallas kernel path
    # (unaligned length -> padding, 2 parallel grid steps).
    boxes_big = jax.random.normal(kb2, (2, 10243, 4), dtype=jnp.float32) * 20.0
    out_big = jax.block_until_ready(clip_boxes(boxes_big, img))
    ref_big = _torch_style_reference(boxes_big, img)
    assert out_big.shape == boxes_big.shape and out_big.dtype == boxes_big.dtype
    assert jnp.allclose(out_big, ref_big), "large-shape mismatch vs reference"

    print("KERNEL_OK")
</pallas_src>

<mosaic_0001>
module attributes {stable_mosaic.version = 11 : i64} {
  func.func @_clip_boxes_kernel(%arg0: i32, %arg1: memref<96x512xf32, #tpu.memory_space<vmem>>, %arg2: memref<96x512xf32, #tpu.memory_space<vmem>>) attributes {dimension_semantics = [#tpu.dimension_semantics<parallel>], iteration_bounds = array<i64: 2>, scalar_prefetch = 0 : i64, scratch_operands = 0 : i64, tpu.core_type = #tpu.core_type<tc>, window_params = [{transform_indices = @transform_0, window_bounds = array<i64: 96, 512>}, {transform_indices = @transform_1, window_bounds = array<i64: 96, 512>}]} {
    %c0 = arith.constant 0 : index
    %c0_0 = arith.constant 0 : index
    %0 = vector.load %arg1[%c0, %c0_0] : memref<96x512xf32, #tpu.memory_space<vmem>>, vector<96x512xf32>
    %1 = tpu.iota {dimensions = array<i32: 1>} : vector<96x512xi32>
    %c4_i32 = arith.constant 4 : i32
    %c0_i32 = arith.constant 0 : i32
    %2 = arith.cmpi eq, %c4_i32, %c0_i32 : i32
    %c1_i32 = arith.constant 1 : i32
    %3 = arith.select %2, %c1_i32, %c4_i32 : i32
    %4 = vector.broadcast %3 : i32 to vector<96x512xi32>
    %5 = arith.remsi %1, %4 : vector<96x512xi32>
    %c0_i32_1 = arith.constant 0 : i32
    %6 = vector.broadcast %c0_i32_1 : i32 to vector<96x512xi32>
    %7 = arith.cmpi ne, %5, %6 : vector<96x512xi32>
    %c0_i32_2 = arith.constant 0 : i32
    %8 = vector.broadcast %c0_i32_2 : i32 to vector<96x512xi32>
    %9 = arith.cmpi slt, %5, %8 : vector<96x512xi32>
    %c0_i32_3 = arith.constant 0 : i32
    %10 = arith.cmpi slt, %3, %c0_i32_3 : i32
    %11 = vector.broadcast %10 : i1 to vector<96x512xi1>
    %12 = vector.broadcast %11 : vector<96x512xi1> to vector<96x512xi1>
    %13 = arith.xori %9, %12 : vector<96x512xi1>
    %14 = arith.andi %13, %7 : vector<96x512xi1>
    %15 = vector.broadcast %3 : i32 to vector<96x512xi32>
    %16 = arith.addi %5, %15 : vector<96x512xi32>
    %17 = arith.select %14, %16, %5 : vector<96x512xi1>, vector<96x512xi32>
    %c2_i32 = arith.constant 2 : i32
    %18 = vector.broadcast %c2_i32 : i32 to vector<96x512xi32>
    %19 = arith.cmpi slt, %17, %18 : vector<96x512xi32>
    %cst = arith.constant 0.000000e+00 : f32
    %cst_4 = arith.constant 0xFF800000 : f32
    %20 = vector.broadcast %cst : f32 to vector<96x512xf32>
    %21 = vector.broadcast %cst_4 : f32 to vector<96x512xf32>
    %22 = arith.select %19, %20, %21 : vector<96x512xi1>, vector<96x512xf32>
    %c2_i32_5 = arith.constant 2 : i32
    %23 = vector.broadcast %c2_i32_5 : i32 to vector<96x512xi32>
    %24 = arith.cmpi eq, %17, %23 : vector<96x512xi32>
    %c3_i32 = arith.constant 3 : i32
    %25 = vector.broadcast %c3_i32 : i32 to vector<96x512xi32>
    %26 = arith.cmpi eq, %17, %25 : vector<96x512xi32>
    %cst_6 = arith.constant 1.600000e+01 : f32
    %cst_7 = arith.constant 0x7F800000 : f32
    %27 = vector.broadcast %cst_6 : f32 to vector<96x512xf32>
    %28 = vector.broadcast %cst_7 : f32 to vector<96x512xf32>
    %29 = arith.select %26, %27, %28 : vector<96x512xi1>, vector<96x512xf32>
    %cst_8 = arith.constant 1.600000e+01 : f32
    %30 = vector.broadcast %cst_8 : f32 to vector<96x512xf32>
    %31 = arith.select %24, %30, %29 : vector<96x512xi1>, vector<96x512xf32>
    %32 = arith.maximumf %0, %22 : vector<96x512xf32>
    %33 = arith.minimumf %32, %31 : vector<96x512xf32>
    %c0_9 = arith.constant 0 : index
    %c0_10 = arith.constant 0 : index
    %34 = vector.load %arg2[%c0_9, %c0_10] : memref<96x512xf32, #tpu.memory_space<vmem>>, vector<96x512xf32>
    tpu.vector_store %arg2[%c0_9, %c0_10], %33 {strides = array<i32>} : memref<96x512xf32, #tpu.memory_space<vmem>>, vector<96x512xf32>,
    return
  }
  func.func @transform_0(%arg0: i32) -> (i32, i32) {
    %c0_i32 = arith.constant 0 : i32
    %c0_i32_0 = arith.constant 0 : i32
    return %arg0, %c0_i32 : i32, i32
  }
  func.func @transform_1(%arg0: i32) -> (i32, i32) {
    %c0_i32 = arith.constant 0 : i32
    %c0_i32_0 = arith.constant 0 : i32
    return %arg0, %c0_i32 : i32, i32
  }
}

</mosaic_0001>

<llo_original>
// kernel: tpu_custom_call.1
$region0: #{tpu_custom_call.1}
  #allocation0 [shape = 'u32[]', space=smem, size = 0x4, offset = 0x4, fixed_abs, tag = 'smem constant byte address 0x4 - core index']
  #allocation1 [shape = 'u32[72,128]{1,0:T(1,128)}', space=vmem, size = 0x9000, scoped, tag = 'internal scratch']
  %s0 = inlined_call_operand.hbm [shape: f32[192,512], index: 0, kind: input, shape index: {}]
  %s1 = inlined_call_operand.hbm [shape: f32[192,512], index: 1, kind: output, shape index: {}]
  %s2 = sld [smem:[#allocation0]]
  $region41: #{tpu_custom_call.1} parent=0
    _
  %s4 = ssub.s32 1, %s2
  %s5 = scalar_select 0, %s4, %s2
  $region1: #{tpu_custom_call.1} parent=0
    #allocation2 [shape = 'u8[393216]{0}', space=vmem, size = 0x60000, scoped, tag = 'input window, operand 0']
    #allocation3 [shape = 's32[2]{0}', space=sflag, size = 0x8, scoped, tag = 'scoped memory for tpu_custom_call.1']
    #allocation4 [shape = 's32[2]{0}', space=sflag, size = 0x8, scoped, tag = 'scoped memory for tpu_custom_call.1']
    #allocation5 [shape = 'u8[393216]{0}', space=vmem, size = 0x60000, scoped, tag = 'output window, operand 0']
    %6 = vsyncpa [#allocation3], 0
    %s7 = scalar_lea.sflag [#allocation3], 1
    %8 = vsyncpa %s7, 0
    %9 = vsyncpa [#allocation4], 0
    %s10 = scalar_lea.sflag [#allocation4], 1
    %11 = vsyncpa %s10, 0
    loop: start=0, step=1, limit=4
    $region2: #{tpu_custom_call.1} parent=1 // loop_pre_header
      _
    $region3: #{tpu_custom_call.1} parent=1 // loop_header
      %s13 = sphi 0, %s17
      %p14 = scmp.ge.s32.totalorder %s13, 4
      %s23 = sphi 0, %s25
      %s26 = sphi 0, %s23
      %s27 = sphi 0, %s26
      %s43 = sphi 0, %s27
      %s49 = sphi 0, %s51
      %s52 = sphi 0, %s49
      %s53 = sphi 0, %s52
      %s69 = sphi 0, %s53
    $region4: #{tpu_custom_call.1} parent=1 // loop_header_branch
      %16 = sbr.rel (%p14) target = $region8
    $region5: #{tpu_custom_call.1} parent=1 // loop_body
      %s18 = ssub.s32 %s13, 1
      %s19 = ssub.s32 %s13, 2
      %s20 = sadd.s32 %s13, 1
      %s21 = ssub.s32 %s13, %s20
      %p22 = scmp.eq.s32.totalorder %s21, 0
      %s24 = sadd.s32 %s23, 1
      %s25 = scalar_select %p22, %s23, %s24
      %p28 = pneg %p22
      %p29 = scmp.eq.s32.totalorder %s13, 1
      %p30 = por %p28, %p29
      %p31 = scmp.ne.s32.totalorder %s23, %s26
      %p32 = scmp.eq.s32.totalorder %s13, 0
      %p33 = por %p31, %p32
      %p34 = scmp.ne.s32.totalorder %s23, %s26
      %p35 = scmp.eq.s32.totalorder %s18, 1
      %p36 = por %p34, %p35
      %p37 = scmp.ne.s32.totalorder %s26, %s27
      %p38 = scmp.eq.s32.totalorder %s18, 0
      %p39 = por %p37, %p38
      %p40 = scmp.ne.s32.totalorder %s26, %s27
      %p41 = scmp.eq.s32.totalorder %s19, 1
      %p42 = por %p40, %p41
      %p44 = scmp.ne.s32.totalorder %s27, %s43
      %p45 = scmp.eq.s32.totalorder %s19, 0
      %p46 = por %p44, %p45
      %s47 = ssub.s32 %s13, %s20
      %p48 = scmp.eq.s32.totalorder %s47, 0
      %s50 = sadd.s32 %s49, 1
      %s51 = scalar_select %p48, %s49, %s50
      %p54 = pneg %p48
      %p55 = scmp.eq.s32.totalorder %s13, 1
      %p56 = por %p54, %p55
      %p57 = scmp.ne.s32.totalorder %s49, %s52
      %p58 = scmp.eq.s32.totalorder %s13, 0
      %p59 = por %p57, %p58
      %p60 = scmp.ne.s32.totalorder %s49, %s52
      %p61 = scmp.eq.s32.totalorder %s18, 1
      %p62 = por %p60, %p61
      %p63 = scmp.ne.s32.totalorder %s52, %s53
      %p64 = scmp.eq.s32.totalorder %s18, 0
      %p65 = por %p63, %p64
      %p66 = scmp.ne.s32.totalorder %s52, %s53
      %p67 = scmp.eq.s32.totalorder %s19, 1
      %p68 = por %p66, %p67
      %p70 = scmp.ne.s32.totalorder %s53, %s69
      %p71 = scmp.eq.s32.totalorder %s19, 0
      %p72 = por %p70, %p71
      %p73 = scmp.le.s32.totalorder 1, %s13
      %p74 = scmp.lt.s32.totalorder %s13, 3
      %p75 = pnand %p73, %p74
      %p76 = pneg %p75
      // Predicated region
      $region9: #{tpu_custom_call.1} parent=5 // pred_check
        _
      $region10: #{tpu_custom_call.1} parent=5 // pred_check_branch
        %78 = sbr.rel (%p75) target = $region12
      $region11: #{tpu_custom_call.1} parent=5 // pred_region
        %s79 = ssub.s32 %s13, 1
      $region12: #{tpu_custom_call.1} parent=5 // pred_fallthru
        _
      %p80 = scmp.lt.s32.totalorder %s13, 2
      // Predicated region
      $region13: #{tpu_custom_call.1} parent=5 // pred_check
        %p81 = pneg %p80
      $region14: #{tpu_custom_call.1} parent=5 // pred_check_branch
        %83 = sbr.rel (%p81) target = $region16
      $region15: #{tpu_custom_call.1} parent=5 // pred_region
        // Predicated region
        $region17: #{tpu_custom_call.1} parent=15 // pred_check
          %p84 = pneg %p33
        $region18: #{tpu_custom_call.1} parent=15 // pred_check_branch
          %86 = sbr.rel (%p84) target = $region20
        $region19: #{tpu_custom_call.1} parent=15 // pred_region
          %s87 = sand.u32 %s23, 1
          %s88 = scalar_lea.sflag [#allocation3], %s87
          %s89 = sand.u32 %s23, 1
          %s90 = smul.addr %s89, 384
          %s91 = scalar_lea.vmem [#allocation2], %s90
          %s92 = smul.u32 12, %s13
          %94 = vsyncadd %s88, 0
          %s95 = smul.addr %s92, 4
          %s96 = smul.addr %s95, 8
          %s97 = scalar_lea.hbm %s0, %s96
          %s98 = sshll.u32 %s97, 4
          %s99 = int_to_ptr.hbm [resolvable:$true] %s98
          %s100 = sshll.u32 %s91, 4
          %s101 = int_to_ptr.vmem [resolvable:$true] %s100
          %106 = dma.hbm_to_vmem [thread:$0]  %s99, 6144, %s101, %s88, 512, 512, 32
        $region20: #{tpu_custom_call.1} parent=15 // pred_fallthru
          _
      $region16: #{tpu_custom_call.1} parent=5 // pred_fallthru
        _
      %p107 = scmp.le.s32.totalorder 1, %s13
      %p108 = scmp.lt.s32.totalorder %s13, 3
      %p109 = pnand %p107, %p108
      %p110 = pneg %p109
      // Predicated region
      $region21: #{tpu_custom_call.1} parent=5 // pred_check
        _
      $region22: #{tpu_custom_call.1} parent=5 // pred_check_branch
        %112 = sbr.rel (%p109) target = $region24
      $region23: #{tpu_custom_call.1} parent=5 // pred_region
        %s113 = ssub.s32 %s13, 1
        %s114 = sand.u32 %s26, 1
        %s115 = scalar_lea.sflag [#allocation3], %s114
        %s116 = sand.u32 %s26, 1
        %s117 = smul.addr %s116, 384
        %s118 = scalar_lea.vmem [#allocation2], %s117
        // Predicated region
        $region25: #{tpu_custom_call.1} parent=23 // pred_check
          %p119 = pneg %p39
        $region26: #{tpu_custom_call.1} parent=23 // pred_check_branch
          %121 = sbr.rel (%p119) target = $region28
        $region27: #{tpu_custom_call.1} parent=23 // pred_region
          %123 = dma.done %s115, 6144
        $region28: #{tpu_custom_call.1} parent=23 // pred_fallthru
          _
        %s124 = sand.u32 %s26, 1
        %s125 = scalar_lea.sflag [#allocation3], %s124
        %s126 = sand.u32 %s26, 1
        %s127 = smul.addr %s126, 384
        %s128 = scalar_lea.vmem [#allocation2], %s127
        %p129 = pneg %p39
        %p130 = pneg %p36
        %p131 = pneg %p65
        %p132 = pneg %p62
        %s133 = sand.u32 %s52, 1
        %s134 = scalar_lea.sflag [#allocation4], %s133
        %s135 = sand.u32 %s52, 1
        %s136 = smul.addr %s135, 384
        %s137 = scalar_lea.vmem [#allocation5], %s136
        %s138 = smul.u32 12, %s18
        %s139 = smul.u32 12, %s18
        %v140 = vld [vmem:[%s118] sm:$0xff]
        %v141 = vld [vmem:[%s118 + $0x8] sm:$0xff]
        %v142 = vld [vmem:[%s118 + $0x10] sm:$0xff]
        %v143 = vld [vmem:[%s118 + $0x18] sm:$0xff]
        %v144 = vld [vmem:[%s118 + $0x20] sm:$0xff]
        %v145 = vld [vmem:[%s118 + $0x28] sm:$0xff]
        %v146 = vld [vmem:[%s118 + $0x30] sm:$0xff]
        %v147 = vld [vmem:[%s118 + $0x38] sm:$0xff]
        %v148 = vld [vmem:[%s118 + $0x40] sm:$0xff]
        %v149 = vld [vmem:[%s118 + $0x48] sm:$0xff]
        %v150 = vld [vmem:[%s118 + $0x50] sm:$0xff]
        %v151 = vld [vmem:[%s118 + $0x58] sm:$0xff]
        %v152 = vld [vmem:[%s118 + $0x60] sm:$0xff]
        %v153 = vld [vmem:[%s118 + $0x68] sm:$0xff]
        %v154 = vld [vmem:[%s118 + $0x70] sm:$0xff]
        %v155 = vld [vmem:[%s118 + $0x78] sm:$0xff]
        %v156 = vld [vmem:[%s118 + $0x80] sm:$0xff]
        %v157 = vld [vmem:[%s118 + $0x88] sm:$0xff]
        %v158 = vld [vmem:[%s118 + $0x90] sm:$0xff]
        %v159 = vld [vmem:[%s118 + $0x98] sm:$0xff]
        %v160 = vld [vmem:[%s118 + $0xa0] sm:$0xff]
        %v161 = vld [vmem:[%s118 + $0xa8] sm:$0xff]
        %v162 = vld [vmem:[%s118 + $0xb0] sm:$0xff]
        %v163 = vld [vmem:[%s118 + $0xb8] sm:$0xff]
        %v164 = vld [vmem:[%s118 + $0xc0] sm:$0xff]
        %v165 = vld [vmem:[%s118 + $0xc8] sm:$0xff]
        %v166 = vld [vmem:[%s118 + $0xd0] sm:$0xff]
        %v167 = vld [vmem:[%s118 + $0xd8] sm:$0xff]
        %v168 = vld [vmem:[%s118 + $0xe0] sm:$0xff]
        %v169 = vld [vmem:[%s118 + $0xe8] sm:$0xff]
        %v170 = vld [vmem:[%s118 + $0xf0] sm:$0xff]
        %v171 = vld [vmem:[%s118 + $0xf8] sm:$0xff]
        %v172 = vld [vmem:[%s118 + $0x100] sm:$0xff]
        %v173 = vld [vmem:[%s118 + $0x108] sm:$0xff]
        %v174 = vld [vmem:[%s118 + $0x110] sm:$0xff]
        %v175 = vld [vmem:[%s118 + $0x118] sm:$0xff]
        %v176 = vld [vmem:[%s118 + $0x120] sm:$0xff]
        %v177 = vld [vmem:[%s118 + $0x128] sm:$0xff]
        %v178 = vld [vmem:[%s118 + $0x130] sm:$0xff]
        %v179 = vld [vmem:[%s118 + $0x138] sm:$0xff]
        %v180 = vld [vmem:[%s118 + $0x140] sm:$0xff]
        %v181 = vld [vmem:[%s118 + $0x148] sm:$0xff]
        %v182 = vld [vmem:[%s118 + $0x150] sm:$0xff]
        %v183 = vld [vmem:[%s118 + $0x158] sm:$0xff]
        %v184 = vld [vmem:[%s118 + $0x160] sm:$0xff]
        %v185 = vld [vmem:[%s118 + $0x168] sm:$0xff]
        %v186 = vld [vmem:[%s118 + $0x170] sm:$0xff]
        %v187 = vld [vmem:[%s118 + $0x178] sm:$0xff]
        %v188 = vlaneseq
        %v189 = vand.u32 %v188, 127
        %v190 = vadd.s32 %v189, 128
        %v191 = vadd.s32 %v189, 256
        %v192 = vadd.s32 %v189, 384
        %vm193 = vcmp.lt.s32.totalorder %v189, 0
        %v194 = vsub.s32 0, %v189
        %v195 = vsel %vm193, %v194, %v189
        %v196 = vshrl.u32 %v195, 2
        %v197 = vand.u32 %v195, 3
        %v198 = vsub.s32 0, %v197
        %v199 = vsel %vm193, %v198, %v197
        %vm200 = vcmp.lt.s32.totalorder %v190, 0
        %v201 = vsub.s32 0, %v190
        %v202 = vsel %vm200, %v201, %v190
        %v203 = vshrl.u32 %v202, 2
        %v204 = vand.u32 %v202, 3
        %v205 = vsub.s32 0, %v204
        %v206 = vsel %vm200, %v205, %v204
        %vm207 = vcmp.lt.s32.totalorder %v191, 0
        %v208 = vsub.s32 0, %v191
        %v209 = vsel %vm207, %v208, %v191
        %v210 = vshrl.u32 %v209, 2
        %v211 = vand.u32 %v209, 3
        %v212 = vsub.s32 0, %v211
        %v213 = vsel %vm207, %v212, %v211
        %vm214 = vcmp.lt.s32.totalorder %v192, 0
        %v215 = vsub.s32 0, %v192
        %v216 = vsel %vm214, %v215, %v192
        %v217 = vshrl.u32 %v216, 2
        %v218 = vand.u32 %v216, 3
        %v219 = vsub.s32 0, %v218
        %v220 = vsel %vm214, %v219, %v218
        %vm221 = vcmp.ne.s32.totalorder %v199, 0
        %vm222 = vcmp.ne.s32.totalorder %v206, 0
        %vm223 = vcmp.ne.s32.totalorder %v213, 0
        %vm224 = vcmp.ne.s32.totalorder %v220, 0
        %vm225 = vcmp.lt.s32.totalorder %v199, 0
        %vm226 = vcmp.lt.s32.totalorder %v206, 0
        %vm227 = vcmp.lt.s32.totalorder %v213, 0
        %vm228 = vcmp.lt.s32.totalorder %v220, 0
        %vm229 = vmand %vm225, %vm221
        %vm230 = vmand %vm226, %vm222
        %vm231 = vmand %vm227, %vm223
        %vm232 = vmand %vm228, %vm224
        %v233 = vadd.s32 %v199, 4
        %v234 = vadd.s32 %v206, 4
        %v235 = vadd.s32 %v213, 4
        %v236 = vadd.s32 %v220, 4
        %v237 = vsel %vm229, %v233, %v199
        %v238 = vsel %vm230, %v234, %v206
        %v239 = vsel %vm231, %v235, %v213
        %v240 = vsel %vm232, %v236, %v220
        %vm241 = vcmp.lt.s32.totalorder %v237, 2
        %vm242 = vcmp.lt.s32.totalorder %v238, 2
        %vm243 = vcmp.lt.s32.totalorder %v239, 2
        %vm244 = vcmp.lt.s32.totalorder %v240, 2
        %v245 = vsel %vm241, 0.0, -inf
        %v246 = vsel %vm242, 0.0, -inf
        %v247 = vsel %vm243, 0.0, -inf
        %v248 = vsel %vm244, 0.0, -inf
        %vm249 = vcmp.eq.s32.totalorder %v237, 2
        %vm250 = vcmp.eq.s32.totalorder %v238, 2
        %vm251 = vcmp.eq.s32.totalorder %v239, 2
        %vm252 = vcmp.eq.s32.totalorder %v240, 2
        %vm253 = vcmp.eq.s32.totalorder %v237, 3
        %vm254 = vcmp.eq.s32.totalorder %v238, 3
        %vm255 = vcmp.eq.s32.totalorder %v239, 3
        %vm256 = vcmp.eq.s32.totalorder %v240, 3
        %v257 = vsel %vm253, 16.0, inf
        %v258 = vsel %vm254, 16.0, inf
        %v259 = vsel %vm255, 16.0, inf
        %v260 = vsel %vm256, 16.0, inf
        %v261 = vsel %vm249, 16.0, %v257
        %v262 = vsel %vm250, 16.0, %v258
        %v263 = vsel %vm251, 16.0, %v259
        %v264 = vsel %vm252, 16.0, %v260
        %v265 = vmax.f32 %v140, %v245
        %v266 = vmax.f32 %v141, %v246
        %v267 = vmax.f32 %v142, %v247
        %v268 = vmax.f32 %v143, %v248
        %v269 = vmax.f32 %v144, %v245
        %v270 = vmax.f32 %v145, %v246
        %v271 = vmax.f32 %v146, %v247
        %v272 = vmax.f32 %v147, %v248
        %v273 = vmax.f32 %v148, %v245
        %v274 = vmax.f32 %v149, %v246
        %v275 = vmax.f32 %v150, %v247
        %v276 = vmax.f32 %v151, %v248
        %v277 = vmax.f32 %v152, %v245
        %v278 = vmax.f32 %v153, %v246
        %v279 = vmax.f32 %v154, %v247
        %v280 = vmax.f32 %v155, %v248
        %v281 = vmax.f32 %v156, %v245
        %v282 = vmax.f32 %v157, %v246
        %v283 = vmax.f32 %v158, %v247
        %v284 = vmax.f32 %v159, %v248
        %v285 = vmax.f32 %v160, %v245
        %v286 = vmax.f32 %v161, %v246
        %v287 = vmax.f32 %v162, %v247
        %v288 = vmax.f32 %v163, %v248
        %v289 = vmax.f32 %v164, %v245
        %v290 = vmax.f32 %v165, %v246
        %v291 = vmax.f32 %v166, %v247
        %v292 = vmax.f32 %v167, %v248
        %v293 = vmax.f32 %v168, %v245
        %v294 = vmax.f32 %v169, %v246
        %v295 = vmax.f32 %v170, %v247
        %v296 = vmax.f32 %v171, %v248
        %v297 = vmax.f32 %v172, %v245
        %v298 = vmax.f32 %v173, %v246
        %v299 = vmax.f32 %v174, %v247
        %v300 = vmax.f32 %v175, %v248
        %v301 = vmax.f32 %v176, %v245
        %v302 = vmax.f32 %v177, %v246
        %v303 = vmax.f32 %v178, %v247
        %v304 = vmax.f32 %v179, %v248
        %v305 = vmax.f32 %v180, %v245
        %v306 = vmax.f32 %v181, %v246
        %v307 = vmax.f32 %v182, %v247
        %v308 = vmax.f32 %v183, %v248
        %v309 = vmax.f32 %v184, %v245
        %v310 = vmax.f32 %v185, %v246
        %v311 = vmax.f32 %v186, %v247
        %v312 = vmax.f32 %v187, %v248
        %v313 = vmin.f32 %v265, %v261
        %v314 = vmin.f32 %v266, %v262
        %v315 = vmin.f32 %v267, %v263
        %v316 = vmin.f32 %v268, %v264
        %v317 = vmin.f32 %v269, %v261
        %v318 = vmin.f32 %v270, %v262
        %v319 = vmin.f32 %v271, %v263
        %v320 = vmin.f32 %v272, %v264
        %v321 = vmin.f32 %v273, %v261
        %v322 = vmin.f32 %v274, %v262
        %v323 = vmin.f32 %v275, %v263
        %v324 = vmin.f32 %v276, %v264
        %v325 = vmin.f32 %v277, %v261
        %v326 = vmin.f32 %v278, %v262
        %v327 = vmin.f32 %v279, %v263
        %v328 = vmin.f32 %v280, %v264
        %v329 = vmin.f32 %v281, %v261
        %v330 = vmin.f32 %v282, %v262
        %v331 = vmin.f32 %v283, %v263
        %v332 = vmin.f32 %v284, %v264
        %v333 = vmin.f32 %v285, %v261
        %v334 = vmin.f32 %v286, %v262
        %v335 = vmin.f32 %v287, %v263
        %v336 = vmin.f32 %v288, %v264
        %v337 = vmin.f32 %v289, %v261
        %v338 = vmin.f32 %v290, %v262
        %v339 = vmin.f32 %v291, %v263
        %v340 = vmin.f32 %v292, %v264
        %v341 = vmin.f32 %v293, %v261
        %v342 = vmin.f32 %v294, %v262
        %v343 = vmin.f32 %v295, %v263
        %v344 = vmin.f32 %v296, %v264
        %v345 = vmin.f32 %v297, %v261
        %v346 = vmin.f32 %v298, %v262
        %v347 = vmin.f32 %v299, %v263
        %v348 = vmin.f32 %v300, %v264
        %v349 = vmin.f32 %v301, %v261
        %v350 = vmin.f32 %v302, %v262
        %v351 = vmin.f32 %v303, %v263
        %v352 = vmin.f32 %v304, %v264
        %v353 = vmin.f32 %v305, %v261
        %v354 = vmin.f32 %v306, %v262
        %v355 = vmin.f32 %v307, %v263
        %v356 = vmin.f32 %v308, %v264
        %v357 = vmin.f32 %v309, %v261
        %v358 = vmin.f32 %v310, %v262
        %v359 = vmin.f32 %v311, %v263
        %v360 = vmin.f32 %v312, %v264
        %361 = vst [vmem:[%s137] sm:$0xff] %v313
        %362 = vst [vmem:[%s137 + $0x8] sm:$0xff] %v314
        %363 = vst [vmem:[%s137 + $0x10] sm:$0xff] %v315
        %364 = vst [vmem:[%s137 + $0x18] sm:$0xff] %v316
        %365 = vst [vmem:[%s137 + $0x20] sm:$0xff] %v317
        %366 = vst [vmem:[%s137 + $0x28] sm:$0xff] %v318
        %367 = vst [vmem:[%s137 + $0x30] sm:$0xff] %v319
        %368 = vst [vmem:[%s137 + $0x38] sm:$0xff] %v320
        %369 = vst [vmem:[%s137 + $0x40] sm:$0xff] %v321
        %370 = vst [vmem:[%s137 + $0x48] sm:$0xff] %v322
        %371 = vst [vmem:[%s137 + $0x50] sm:$0xff] %v323
        %372 = vst [vmem:[%s137 + $0x58] sm:$0xff] %v324
        %373 = vst [vmem:[%s137 + $0x60] sm:$0xff] %v325
        %374 = vst [vmem:[%s137 + $0x68] sm:$0xff] %v326
        %375 = vst [vmem:[%s137 + $0x70] sm:$0xff] %v327
        %376 = vst [vmem:[%s137 + $0x78] sm:$0xff] %v328
        %377 = vst [vmem:[%s137 + $0x80] sm:$0xff] %v329
        %378 = vst [vmem:[%s137 + $0x88] sm:$0xff] %v330
        %379 = vst [vmem:[%s137 + $0x90] sm:$0xff] %v331
        %380 = vst [vmem:[%s137 + $0x98] sm:$0xff] %v332
        %381 = vst [vmem:[%s137 + $0xa0] sm:$0xff] %v333
        %382 = vst [vmem:[%s137 + $0xa8] sm:$0xff] %v334
        %383 = vst [vmem:[%s137 + $0xb0] sm:$0xff] %v335
        %384 = vst [vmem:[%s137 + $0xb8] sm:$0xff] %v336
        %385 = vst [vmem:[%s137 + $0xc0] sm:$0xff] %v337
        %386 = vst [vmem:[%s137 + $0xc8] sm:$0xff] %v338
        %387 = vst [vmem:[%s137 + $0xd0] sm:$0xff] %v339
        %388 = vst [vmem:[%s137 + $0xd8] sm:$0xff] %v340
        %389 = vst [vmem:[%s137 + $0xe0] sm:$0xff] %v341
        %390 = vst [vmem:[%s137 + $0xe8] sm:$0xff] %v342
        %391 = vst [vmem:[%s137 + $0xf0] sm:$0xff] %v343
        %392 = vst [vmem:[%s137 + $0xf8] sm:$0xff] %v344
        %393 = vst [vmem:[%s137 + $0x100] sm:$0xff] %v345
        %394 = vst [vmem:[%s137 + $0x108] sm:$0xff] %v346
        %395 = vst [vmem:[%s137 + $0x110] sm:$0xff] %v347
        %396 = vst [vmem:[%s137 + $0x118] sm:$0xff] %v348
        %397 = vst [vmem:[%s137 + $0x120] sm:$0xff] %v349
        %398 = vst [vmem:[%s137 + $0x128] sm:$0xff] %v350
        %399 = vst [vmem:[%s137 + $0x130] sm:$0xff] %v351
        %400 = vst [vmem:[%s137 + $0x138] sm:$0xff] %v352
        %401 = vst [vmem:[%s137 + $0x140] sm:$0xff] %v353
        %402 = vst [vmem:[%s137 + $0x148] sm:$0xff] %v354
        %403 = vst [vmem:[%s137 + $0x150] sm:$0xff] %v355
        %404 = vst [vmem:[%s137 + $0x158] sm:$0xff] %v356
        %405 = vst [vmem:[%s137 + $0x160] sm:$0xff] %v357
        %406 = vst [vmem:[%s137 + $0x168] sm:$0xff] %v358
        %407 = vst [vmem:[%s137 + $0x170] sm:$0xff] %v359
        %408 = vst [vmem:[%s137 + $0x178] sm:$0xff] %v360
        %s409 = sand.u32 %s52, 1
        %s410 = scalar_lea.sflag [#allocation4], %s409
        %s411 = sand.u32 %s52, 1
        %s412 = smul.addr %s411, 384
        %s413 = scalar_lea.vmem [#allocation5], %s412
        // Predicated region
        $region29: #{tpu_custom_call.1} parent=23 // pred_check
          %p414 = pneg %p62
        $region30: #{tpu_custom_call.1} parent=23 // pred_check_branch
          %416 = sbr.rel (%p414) target = $region32
        $region31: #{tpu_custom_call.1} parent=23 // pred_region
          %s417 = smul.u32 12, %s18
          %419 = vsyncadd %s410, 0
          %s420 = smul.addr %s417, 4
          %s421 = smul.addr %s420, 8
          %s422 = scalar_lea.hbm %s1, %s421
          %s423 = sshll.u32 %s413, 4
          %s424 = int_to_ptr.vmem [resolvable:$true] %s423
          %s425 = sshll.u32 %s422, 4
          %s426 = int_to_ptr.hbm [resolvable:$true] %s425
          %431 = dma.vmem_to_hbm [thread:$0]  %s424, 6144, %s426, %s410, 512, 512, 32
        $region32: #{tpu_custom_call.1} parent=23 // pred_fallthru
          _
      $region24: #{tpu_custom_call.1} parent=5 // pred_fallthru
        _
      %p432 = scmp.le.s32.totalorder 2, %s13
      // Predicated region
      $region33: #{tpu_custom_call.1} parent=5 // pred_check
        %p433 = pneg %p432
      $region34: #{tpu_custom_call.1} parent=5 // pred_check_branch
        %435 = sbr.rel (%p433) target = $region36
      $region35: #{tpu_custom_call.1} parent=5 // pred_region
        %s436 = ssub.s32 %s13, 2
        // Predicated region
        $region37: #{tpu_custom_call.1} parent=35 // pred_check
          %p437 = pneg %p68
        $region38: #{tpu_custom_call.1} parent=35 // pred_check_branch
          %439 = sbr.rel (%p437) target = $region40
        $region39: #{tpu_custom_call.1} parent=35 // pred_region
          %s440 = sand.u32 %s53, 1
          %s441 = scalar_lea.sflag [#allocation4], %s440
          %s442 = sand.u32 %s53, 1
          %s443 = smul.addr %s442, 384
          %s444 = scalar_lea.vmem [#allocation5], %s443
          %446 = dma.done %s441, 6144
        $region40: #{tpu_custom_call.1} parent=35 // pred_fallthru
          _
      $region36: #{tpu_custom_call.1} parent=5 // pred_fallthru
        _
    $region6: #{tpu_custom_call.1} parent=1 // loop_footer
      %s17 = sadd.s32 1, %s13
    $region7: #{tpu_custom_call.1} parent=1 // loop_footer_branch
      %12 = sbr.rel target = $region3
    $region8: #{tpu_custom_call.1} parent=1 // loop_exit
      _
    %447 = vsyncpa [#allocation3], 1
    %s448 = scalar_lea.sflag [#allocation3], 1
    %449 = vsyncpa %s448, 1
    %450 = vsyncpa [#allocation4], 1
    %s451 = scalar_lea.sflag [#allocation4], 1
    %452 = vsyncpa %s451, 1

</llo_original>
